<compile_context>
chip_gen: v6e
topology: v6e:2x2x1
jax: 0.10.0
libtpu: 0.0.40
codegen_flags: <defaults>
</compile_context>

<pallas_src>
import functools
import math

import jax
import jax.numpy as jnp
from jax import lax
from jax.experimental import pallas as pl
from jax.experimental.pallas import tpu as pltpu


def _var_kernel(x_ref, o_ref, *, inv_n, inv_nm1, n_cols, tile_m, tiles_per_shard):
    """One (B, tile_m) tile: per-column unbiased variance, accumulated lane-wise
    into the shard-resident (1, tile_m) output block."""
    s = pl.program_id(0)   # shard over the feature axis ("parallel")
    j = pl.program_id(1)   # tile within shard ("arbitrary" / reduction axis)

    @pl.when(j == 0)
    def _init():
        o_ref[...] = jnp.zeros_like(o_ref)

    # Global column index of every lane in this tile; masks the ragged tail and
    # any fully out-of-range tile produced by an uneven shard split.
    tile_idx = s * tiles_per_shard + j
    col = lax.broadcasted_iota(jnp.int32, (1, tile_m), 1) + tile_idx * tile_m
    valid = col < n_cols                                           # (1, tile_m)

    x = jnp.where(valid, x_ref[...].astype(jnp.float32), 0.0)      # (B, tile_m)
    mean = jnp.sum(x, axis=0, keepdims=True) * inv_n               # (1, tile_m)
    d = x - mean
    # Unbiased (ddof=1) per-column variance, matching torch.var's default.
    # Masked columns are constant 0 -> contribute exactly 0.
    o_ref[...] += jnp.sum(d * d, axis=0, keepdims=True) * inv_nm1


def _pick_tile_m(batch, n_cols, itemsize):
    # Budget the double-buffered (B, tile_m) input block plus a few f32
    # temporaries well under the smallest default scoped VMEM (v5e: 16 MiB);
    # also comfortably inside v7x's 64 MiB physical / 32 MiB default scoped.
    budget = 6 * 1024 * 1024
    per_lane = batch * (2 * itemsize + 3 * 4)
    tile_m = (budget // per_lane) // 128 * 128
    tile_m = max(128, min(tile_m, 32768))
    # No point exceeding the (128-rounded) feature width.
    m_up = ((n_cols + 127) // 128) * 128
    return min(tile_m, m_up)


def normal_loss(x, *, tile_m=None, num_shards=None):
    """JAX/Pallas equivalent of NormalLoss()(x) = mean(var(x, dim=0, unbiased))."""
    B = x.shape[0]
    M = math.prod(x.shape[1:])
    x2 = x.reshape(B, M)

    if tile_m is None:
        tile_m = _pick_tile_m(B, M, x.dtype.itemsize)
    tile_m = max(128, (tile_m // 128) * 128)

    n_tiles = (M + tile_m - 1) // tile_m
    if num_shards is None:
        # Leading parallel axis -> both TensorCores on v7x; harmless on v5e/v6e.
        num_shards = 2 if n_tiles >= 2 else 1
    tiles_per_shard = (n_tiles + num_shards - 1) // num_shards

    inv_n = 1.0 / B
    # B == 1: torch.var(ddof=1) yields NaN; propagate NaN instead of crashing.
    inv_nm1 = (1.0 / (B - 1)) if B > 1 else float("nan")

    kernel = functools.partial(
        _var_kernel,
        inv_n=inv_n,
        inv_nm1=inv_nm1,
        n_cols=M,
        tile_m=tile_m,
        tiles_per_shard=tiles_per_shard,
    )

    def x_index_map(s, j):
        # Clamp so an uneven shard split never indexes past the last real block;
        # the in-kernel lane mask zeroes any duplicated / out-of-range columns.
        return (0, jnp.minimum(s * tiles_per_shard + j, n_tiles - 1))

    partial_sums = pl.pallas_call(
        kernel,
        out_shape=jax.ShapeDtypeStruct((1, num_shards * tile_m), jnp.float32),
        grid_spec=pltpu.PrefetchScalarGridSpec(
            num_scalar_prefetch=0,
            grid=(num_shards, tiles_per_shard),
            in_specs=[pl.BlockSpec((B, tile_m), x_index_map)],
            out_specs=pl.BlockSpec((1, tile_m), lambda s, j: (0, s)),
        ),
        compiler_params=pltpu.CompilerParams(
            dimension_semantics=("parallel", "arbitrary"),
        ),
    )(x2)

    # Tiny final cross-lane reduce + normalization (cheap host-side XLA op).
    return (jnp.sum(partial_sums) / jnp.float32(M)).astype(x.dtype)


if __name__ == "__main__":
    key = jax.random.PRNGKey(0)

    # Primary check: NCHW input matching the module's expected usage.
    x = jax.random.normal(key, (2, 4, 16, 16), dtype=jnp.float32)
    loss = normal_loss(x)
    jax.block_until_ready(loss)
    ref = jnp.mean(jnp.var(x, axis=0, ddof=1))
    assert jnp.allclose(loss, ref, rtol=1e-5, atol=1e-6), (loss, ref)

    # Secondary check: ragged feature width + multi-tile + 2-shard path.
    key2 = jax.random.PRNGKey(1)
    y = jax.random.normal(key2, (4, 3, 40, 17), dtype=jnp.float32)  # M = 2040
    loss2 = normal_loss(y, tile_m=256)  # forces 8 tiles across 2 shards
    jax.block_until_ready(loss2)
    ref2 = jnp.mean(jnp.var(y, axis=0, ddof=1))
    assert jnp.allclose(loss2, ref2, rtol=1e-5, atol=1e-6), (loss2, ref2)

    print("KERNEL_OK")
</pallas_src>

<mosaic_0001>
module attributes {stable_mosaic.version = 11 : i64} {
  func.func @_var_kernel(%arg0: i32, %arg1: i32, %arg2: memref<2x1024xf32, #tpu.memory_space<vmem>>, %arg3: memref<1x1024xf32, #tpu.memory_space<vmem>>) attributes {dimension_semantics = [#tpu.dimension_semantics<parallel>, #tpu.dimension_semantics<arbitrary>], iteration_bounds = array<i64: 1, 1>, scalar_prefetch = 0 : i64, scratch_operands = 0 : i64, tpu.core_type = #tpu.core_type<tc>, window_params = [{transform_indices = @transform_0, window_bounds = array<i64: 2, 1024>}, {transform_indices = @transform_1, window_bounds = array<i64: 1, 1024>}]} {
    %c0_i32 = arith.constant 0 : i32
    %0 = arith.cmpi eq, %arg1, %c0_i32 : i32
    %1 = arith.extui %0 : i1 to i32
    %c0_i32_0 = arith.constant 0 : i32
    %2 = arith.cmpi ne, %1, %c0_i32_0 : i32
    scf.if %2 {
      %cst_11 = arith.constant 0.000000e+00 : f32
      %30 = vector.broadcast %cst_11 : f32 to vector<1x1024xf32>
      %c0_12 = arith.constant 0 : index
      %c0_13 = arith.constant 0 : index
      %31 = vector.load %arg3[%c0_12, %c0_13] : memref<1x1024xf32, #tpu.memory_space<vmem>>, vector<1x1024xf32>
      tpu.vector_store %arg3[%c0_12, %c0_13], %30 {strides = array<i32>} : memref<1x1024xf32, #tpu.memory_space<vmem>>, vector<1x1024xf32>,
    } else {
    }
    %c1_i32 = arith.constant 1 : i32
    %3 = arith.muli %arg0, %c1_i32 : i32
    %4 = arith.addi %3, %arg1 : i32
    %5 = tpu.iota {dimensions = array<i32: 1>} : vector<1x1024xi32>
    %c1024_i32 = arith.constant 1024 : i32
    %6 = arith.muli %4, %c1024_i32 : i32
    %7 = vector.broadcast %6 : i32 to vector<1x1024xi32>
    %8 = arith.addi %5, %7 : vector<1x1024xi32>
    %c1024_i32_1 = arith.constant 1024 : i32
    %9 = vector.broadcast %c1024_i32_1 : i32 to vector<1x1024xi32>
    %10 = arith.cmpi slt, %8, %9 : vector<1x1024xi32>
    %c0 = arith.constant 0 : index
    %c0_2 = arith.constant 0 : index
    %11 = vector.load %arg2[%c0, %c0_2] : memref<2x1024xf32, #tpu.memory_space<vmem>>, vector<2x1024xf32>
    %cst = arith.constant 0.000000e+00 : f32
    %12 = vector.shape_cast %10 : vector<1x1024xi1> to vector<1x1024xi1>
    %13 = vector.broadcast %12 : vector<1x1024xi1> to vector<2x1024xi1>
    %14 = vector.broadcast %cst : f32 to vector<2x1024xf32>
    %15 = arith.select %13, %11, %14 : vector<2x1024xi1>, vector<2x1024xf32>
    %cst_3 = arith.constant dense<0.000000e+00> : vector<1024xf32>
    %16 = vector.multi_reduction <add>, %15, %cst_3 [0] : vector<2x1024xf32> to vector<1024xf32>
    %17 = vector.shape_cast %16 : vector<1024xf32> to vector<1x1024xf32>
    %cst_4 = arith.constant 5.000000e-01 : f32
    %18 = vector.broadcast %cst_4 : f32 to vector<1x1024xf32>
    %19 = arith.mulf %17, %18 : vector<1x1024xf32>
    %20 = vector.broadcast %19 : vector<1x1024xf32> to vector<2x1024xf32>
    %21 = arith.subf %15, %20 : vector<2x1024xf32>
    %c0_5 = arith.constant 0 : index
    %c0_6 = arith.constant 0 : index
    %22 = vector.load %arg3[%c0_5, %c0_6] : memref<1x1024xf32, #tpu.memory_space<vmem>>, vector<1x1024xf32>
    %23 = arith.mulf %21, %21 : vector<2x1024xf32>
    %cst_7 = arith.constant dense<0.000000e+00> : vector<1024xf32>
    %24 = vector.multi_reduction <add>, %23, %cst_7 [0] : vector<2x1024xf32> to vector<1024xf32>
    %25 = vector.shape_cast %24 : vector<1024xf32> to vector<1x1024xf32>
    %cst_8 = arith.constant 1.000000e+00 : f32
    %26 = vector.broadcast %cst_8 : f32 to vector<1x1024xf32>
    %27 = arith.mulf %25, %26 : vector<1x1024xf32>
    %28 = arith.addf %22, %27 : vector<1x1024xf32>
    %c0_9 = arith.constant 0 : index
    %c0_10 = arith.constant 0 : index
    %29 = vector.load %arg3[%c0_9, %c0_10] : memref<1x1024xf32, #tpu.memory_space<vmem>>, vector<1x1024xf32>
    tpu.vector_store %arg3[%c0_9, %c0_10], %28 {strides = array<i32>} : memref<1x1024xf32, #tpu.memory_space<vmem>>, vector<1x1024xf32>,
    return
  }
  func.func @transform_0(%arg0: i32, %arg1: i32) -> (i32, i32) {
    %c1_i32 = arith.constant 1 : i32
    %0 = arith.muli %arg0, %c1_i32 : i32
    %1 = arith.addi %0, %arg1 : i32
    %c0_i32 = arith.constant 0 : i32
    %2 = arith.minsi %1, %c0_i32 : i32
    %c0_i32_0 = arith.constant 0 : i32
    %c0_i32_1 = arith.constant 0 : i32
    return %c0_i32_0, %2 : i32, i32
  }
  func.func @transform_1(%arg0: i32, %arg1: i32) -> (i32, i32) {
    %c0_i32 = arith.constant 0 : i32
    %c0_i32_0 = arith.constant 0 : i32
    return %c0_i32, %arg0 : i32, i32
  }
}

</mosaic_0001>

<llo_original>
// kernel: tpu_custom_call.1
$region0: #{tpu_custom_call.1}
  #allocation0 [shape = 'u32[]', space=smem, size = 0x4, offset = 0x4, fixed_abs, tag = 'smem constant byte address 0x4 - core index']
  #allocation1 [shape = 'u32[144,128]{1,0:T(1,128)}', space=vmem, size = 0x12000, scoped, tag = 'internal scratch']
  %s0 = inlined_call_operand.hbm [shape: f32[2,1024], index: 0, kind: input, shape index: {}]
  %s1 = inlined_call_operand.hbm [shape: f32[1,1024], index: 1, kind: output, shape index: {}]
  %s2 = sld [smem:[#allocation0]]
  $region22: #{tpu_custom_call.1} parent=0
    _
  %s4 = ssub.s32 1, %s2
  %s5 = scalar_select 0, %s4, %s2
  $region1: #{tpu_custom_call.1} parent=0
    #allocation2 [shape = 'u8[8192]{0}', space=vmem, size = 0x2000, scoped, tag = 'input window, operand 0, single buffered']
    #allocation3 [shape = 's32[1]{0}', space=sflag, size = 0x4, scoped, tag = 'scoped memory for tpu_custom_call.1']
    #allocation4 [shape = 's32[1]{0}', space=sflag, size = 0x4, scoped, tag = 'scoped memory for tpu_custom_call.1']
    #allocation5 [shape = 'u8[4096]{0}', space=vmem, size = 0x1000, scoped, tag = 'output window, operand 0, single buffered']
    %6 = vsyncpa [#allocation3], 0
    %7 = vsyncpa [#allocation4], 0
    // Predicated region
    $region2: #{tpu_custom_call.1} parent=1 // pred_check
      _
    $region3: #{tpu_custom_call.1} parent=1 // pred_check_branch
      %9 = sbr.rel (0) target = $region5
    $region4: #{tpu_custom_call.1} parent=1 // pred_region
      %s10 = sadd.s32 0, 0
      %p11 = scmp.lt.s32.totalorder %s10, 0
      %s12 = scalar_select %p11, %s10, 0
      %s13 = smul.u32 8, %s12
      %s15 = ssub.s32 256, 256
      %16 = vsyncadd [#allocation3], %s15
      %s17 = smul.addr %s13, 32
      %s18 = scalar_lea.hbm %s0, %s17
      %s20 = sshll.u32 [#allocation2], 4
      %s21 = int_to_ptr.vmem [resolvable:$true] %s20
      %23 = dma.hbm_to_vmem [thread:$0]  %s18, 256, %s21, [#allocation3]
    $region5: #{tpu_custom_call.1} parent=1 // pred_fallthru
      _
    // Predicated region
    $region6: #{tpu_custom_call.1} parent=1 // pred_check
      _
    $region7: #{tpu_custom_call.1} parent=1 // pred_check_branch
      %25 = sbr.rel (0) target = $region9
    $region8: #{tpu_custom_call.1} parent=1 // pred_region
      %26 = dma.done [#allocation3], 256
    $region9: #{tpu_custom_call.1} parent=1 // pred_fallthru
      _
    %s27 = sadd.s32 0, 0
    %p28 = scmp.lt.s32.totalorder %s27, 0
    %s29 = scalar_select %p28, %s27, 0
    %s30 = smul.u32 8, %s29
    %p31 = scmp.eq.s32.totalorder 0, 0
    // Predicated region
    $region10: #{tpu_custom_call.1} parent=1 // pred_check
      %p32 = pneg %p31
    $region11: #{tpu_custom_call.1} parent=1 // pred_check_branch
      %34 = sbr.rel (%p32) target = $region13
    $region12: #{tpu_custom_call.1} parent=1 // pred_region
      %35 = vst [vmem:[#allocation5] sm:$0xff] 0.0
    $region13: #{tpu_custom_call.1} parent=1 // pred_fallthru
      _
    %s36 = sadd.s32 0, 0
    %v37 = vlaneseq
    %v38 = vand.u32 %v37, 127
    %v39 = vadd.s32 %v38, 128
    %v40 = vadd.s32 %v38, 256
    %v41 = vadd.s32 %v38, 384
    %v42 = vadd.s32 %v38, 512
    %v43 = vadd.s32 %v38, 640
    %v44 = vadd.s32 %v38, 768
    %v45 = vadd.s32 %v38, 896
    %s46 = smul.u32 %s36, 1024
    %v47 = vstv %s46
    %v48 = vadd.s32 %v38, %v47
    %v49 = vadd.s32 %v39, %v47
    %v50 = vadd.s32 %v40, %v47
    %v51 = vadd.s32 %v41, %v47
    %v52 = vadd.s32 %v42, %v47
    %v53 = vadd.s32 %v43, %v47
    %v54 = vadd.s32 %v44, %v47
    %v55 = vadd.s32 %v45, %v47
    %vm56 = vcmp.lt.s32.totalorder %v48, 1024
    %vm57 = vcmp.lt.s32.totalorder %v49, 1024
    %vm58 = vcmp.lt.s32.totalorder %v50, 1024
    %vm59 = vcmp.lt.s32.totalorder %v51, 1024
    %vm60 = vcmp.lt.s32.totalorder %v52, 1024
    %vm61 = vcmp.lt.s32.totalorder %v53, 1024
    %vm62 = vcmp.lt.s32.totalorder %v54, 1024
    %vm63 = vcmp.lt.s32.totalorder %v55, 1024
    %v64 = vld [vmem:[#allocation2] sm:$0xff]
    %v65 = vld [vmem:[#allocation2 + $0x8] sm:$0xff]
    %v66 = vsel %vm56, 1, 0
    %v67 = vsel %vm57, 1, 0
    %v68 = vsel %vm58, 1, 0
    %v69 = vsel %vm59, 1, 0
    %v70 = vsel %vm60, 1, 0
    %v71 = vsel %vm61, 1, 0
    %v72 = vsel %vm62, 1, 0
    %v73 = vsel %vm63, 1, 0
    %vm74 = vcmp.eq.s32.totalorder %v66, 1
    %vm75 = vcmp.eq.s32.totalorder %v67, 1
    %vm76 = vcmp.eq.s32.totalorder %v68, 1
    %vm77 = vcmp.eq.s32.totalorder %v69, 1
    %vm78 = vcmp.eq.s32.totalorder %v70, 1
    %vm79 = vcmp.eq.s32.totalorder %v71, 1
    %vm80 = vcmp.eq.s32.totalorder %v72, 1
    %vm81 = vcmp.eq.s32.totalorder %v73, 1
    %v84 = vcombine.high %v64, %v64
    %v86 = vunpack.c.l.s4 1983009808
    %v87 = vunpack.c.0.s8 %v86
    %v88 = vlaneseq
    %v89 = vshrl.u32 %v88, 7
    %v90 = vsub.s32 %v87, %v89
    %v91 = vrot.slane %v64, %v90
    %v93 = vunpack.c.l.s4 1983009808
    %v94 = vunpack.c.0.s8 %v93
    %v95 = vlaneseq
    %v96 = vshrl.u32 %v95, 7
    %v97 = vsub.s32 %v94, %v96
    %v98 = vrot.slane %v84, %v97
    %v99 = vcombine.high %v91, %v91
    %v100 = vcombine.high %v98, %v98
    %v101 = vcombine.high %v65, %v65
    %v103 = vunpack.c.l.s4 1983009808
    %v104 = vunpack.c.0.s8 %v103
    %v105 = vlaneseq
    %v106 = vshrl.u32 %v105, 7
    %v107 = vsub.s32 %v104, %v106
    %v108 = vrot.slane %v65, %v107
    %v110 = vunpack.c.l.s4 1983009808
    %v111 = vunpack.c.0.s8 %v110
    %v112 = vlaneseq
    %v113 = vshrl.u32 %v112, 7
    %v114 = vsub.s32 %v111, %v113
    %v115 = vrot.slane %v101, %v114
    %v116 = vcombine.high %v108, %v108
    %v117 = vcombine.high %v115, %v115
    %v126 = vsel %vm74, %v91, 0.0
    %v127 = vsel %vm75, %v99, 0.0
    %v128 = vsel %vm76, %v98, 0.0
    %v129 = vsel %vm77, %v100, 0.0
    %v130 = vsel %vm78, %v108, 0.0
    %v131 = vsel %vm79, %v116, 0.0
    %v132 = vsel %vm80, %v115, 0.0
    %v133 = vsel %vm81, %v117, 0.0
    %vm134 = vcmask 1041408
    %v135 = vsel %vm134, %v126, 0.0
    %v136 = vrot.slane %v135, 4
    %v137 = vadd.f32 %v135, %v136
    %v138 = vrot.slane %v137, 2
    %v139 = vadd.f32 %v137, %v138
    %v140 = vrot.slane %v139, 1
    %v141 = vadd.f32 %v139, %v140
    %v142 = vsel %vm134, %v127, 0.0
    %v143 = vrot.slane %v142, 4
    %v144 = vadd.f32 %v142, %v143
    %v145 = vrot.slane %v144, 2
    %v146 = vadd.f32 %v144, %v145
    %v147 = vrot.slane %v146, 1
    %v148 = vadd.f32 %v146, %v147
    %v149 = vsel %vm134, %v128, 0.0
    %v150 = vrot.slane %v149, 4
    %v151 = vadd.f32 %v149, %v150
    %v152 = vrot.slane %v151, 2
    %v153 = vadd.f32 %v151, %v152
    %v154 = vrot.slane %v153, 1
    %v155 = vadd.f32 %v153, %v154
    %v156 = vsel %vm134, %v129, 0.0
    %v157 = vrot.slane %v156, 4
    %v158 = vadd.f32 %v156, %v157
    %v159 = vrot.slane %v158, 2
    %v160 = vadd.f32 %v158, %v159
    %v161 = vrot.slane %v160, 1
    %v162 = vadd.f32 %v160, %v161
    %v163 = vsel %vm134, %v130, 0.0
    %v164 = vrot.slane %v163, 4
    %v165 = vadd.f32 %v163, %v164
    %v166 = vrot.slane %v165, 2
    %v167 = vadd.f32 %v165, %v166
    %v168 = vrot.slane %v167, 1
    %v169 = vadd.f32 %v167, %v168
    %v170 = vsel %vm134, %v131, 0.0
    %v171 = vrot.slane %v170, 4
    %v172 = vadd.f32 %v170, %v171
    %v173 = vrot.slane %v172, 2
    %v174 = vadd.f32 %v172, %v173
    %v175 = vrot.slane %v174, 1
    %v176 = vadd.f32 %v174, %v175
    %v177 = vsel %vm134, %v132, 0.0
    %v178 = vrot.slane %v177, 4
    %v179 = vadd.f32 %v177, %v178
    %v180 = vrot.slane %v179, 2
    %v181 = vadd.f32 %v179, %v180
    %v182 = vrot.slane %v181, 1
    %v183 = vadd.f32 %v181, %v182
    %v184 = vsel %vm134, %v133, 0.0
    %v185 = vrot.slane %v184, 4
    %v186 = vadd.f32 %v184, %v185
    %v187 = vrot.slane %v186, 2
    %v188 = vadd.f32 %v186, %v187
    %v189 = vrot.slane %v188, 1
    %v190 = vadd.f32 %v188, %v189
    %v191 = vmul.f32 %v141, 0.5
    %v192 = vmul.f32 %v148, 0.5
    %v193 = vmul.f32 %v155, 0.5
    %v194 = vmul.f32 %v162, 0.5
    %v195 = vmul.f32 %v169, 0.5
    %v196 = vmul.f32 %v176, 0.5
    %v197 = vmul.f32 %v183, 0.5
    %v198 = vmul.f32 %v190, 0.5
    %v199 = vsub.f32 %v126, %v191
    %v200 = vsub.f32 %v127, %v192
    %v201 = vsub.f32 %v128, %v193
    %v202 = vsub.f32 %v129, %v194
    %v203 = vsub.f32 %v130, %v195
    %v204 = vsub.f32 %v131, %v196
    %v205 = vsub.f32 %v132, %v197
    %v206 = vsub.f32 %v133, %v198
    %v207 = vld [vmem:[#allocation5] sm:$0xff]
    %v208 = vmul.f32 %v199, %v199
    %v209 = vmul.f32 %v200, %v200
    %v210 = vmul.f32 %v201, %v201
    %v211 = vmul.f32 %v202, %v202
    %v212 = vmul.f32 %v203, %v203
    %v213 = vmul.f32 %v204, %v204
    %v214 = vmul.f32 %v205, %v205
    %v215 = vmul.f32 %v206, %v206
    %v216 = vsel %vm134, %v208, 0.0
    %v217 = vrot.slane %v216, 4
    %v218 = vadd.f32 %v216, %v217
    %v219 = vrot.slane %v218, 2
    %v220 = vadd.f32 %v218, %v219
    %v221 = vrot.slane %v220, 1
    %v222 = vadd.f32 %v220, %v221
    %v223 = vsel %vm134, %v209, 0.0
    %v224 = vrot.slane %v223, 4
    %v225 = vadd.f32 %v223, %v224
    %v226 = vrot.slane %v225, 2
    %v227 = vadd.f32 %v225, %v226
    %v228 = vrot.slane %v227, 1
    %v229 = vadd.f32 %v227, %v228
    %v230 = vsel %vm134, %v210, 0.0
    %v231 = vrot.slane %v230, 4
    %v232 = vadd.f32 %v230, %v231
    %v233 = vrot.slane %v232, 2
    %v234 = vadd.f32 %v232, %v233
    %v235 = vrot.slane %v234, 1
    %v236 = vadd.f32 %v234, %v235
    %v237 = vsel %vm134, %v211, 0.0
    %v238 = vrot.slane %v237, 4
    %v239 = vadd.f32 %v237, %v238
    %v240 = vrot.slane %v239, 2
    %v241 = vadd.f32 %v239, %v240
    %v242 = vrot.slane %v241, 1
    %v243 = vadd.f32 %v241, %v242
    %v244 = vsel %vm134, %v212, 0.0
    %v245 = vrot.slane %v244, 4
    %v246 = vadd.f32 %v244, %v245
    %v247 = vrot.slane %v246, 2
    %v248 = vadd.f32 %v246, %v247
    %v249 = vrot.slane %v248, 1
    %v250 = vadd.f32 %v248, %v249
    %v251 = vsel %vm134, %v213, 0.0
    %v252 = vrot.slane %v251, 4
    %v253 = vadd.f32 %v251, %v252
    %v254 = vrot.slane %v253, 2
    %v255 = vadd.f32 %v253, %v254
    %v256 = vrot.slane %v255, 1
    %v257 = vadd.f32 %v255, %v256
    %v258 = vsel %vm134, %v214, 0.0
    %v259 = vrot.slane %v258, 4
    %v260 = vadd.f32 %v258, %v259
    %v261 = vrot.slane %v260, 2
    %v262 = vadd.f32 %v260, %v261
    %v263 = vrot.slane %v262, 1
    %v264 = vadd.f32 %v262, %v263
    %v265 = vsel %vm134, %v215, 0.0
    %v266 = vrot.slane %v265, 4
    %v267 = vadd.f32 %v265, %v266
    %v268 = vrot.slane %v267, 2
    %v269 = vadd.f32 %v267, %v268
    %v270 = vrot.slane %v269, 1
    %v271 = vadd.f32 %v269, %v270
    %v280 = vcombine.low %v222, %v229
    %v281 = vcombine.low %v236, %v243
    %v282 = vcombine.low %v250, %v257
    %v283 = vcombine.low %v264, %v271
    %v285 = vunpack.c.l.s4 1966171168
    %v286 = vunpack.c.0.s8 %v285
    %v287 = vlaneseq
    %v288 = vshrl.u32 %v287, 7
    %v289 = vsub.s32 %v286, %v288
    %v290 = vrot.slane %v280, %v289
    %v292 = vunpack.c.l.s4 1966171168
    %v293 = vunpack.c.0.s8 %v292
    %v294 = vlaneseq
    %v295 = vshrl.u32 %v294, 7
    %v296 = vsub.s32 %v293, %v295
    %v297 = vrot.slane %v281, %v296
    %v299 = vunpack.c.l.s4 1966171168
    %v300 = vunpack.c.0.s8 %v299
    %v301 = vlaneseq
    %v302 = vshrl.u32 %v301, 7
    %v303 = vsub.s32 %v300, %v302
    %v304 = vrot.slane %v282, %v303
    %v306 = vunpack.c.l.s4 1966171168
    %v307 = vunpack.c.0.s8 %v306
    %v308 = vlaneseq
    %v309 = vshrl.u32 %v308, 7
    %v310 = vsub.s32 %v307, %v309
    %v311 = vrot.slane %v283, %v310
    %v312 = vcombine.low %v290, %v297
    %v313 = vcombine.low %v304, %v311
    %v315 = vunpack.c.l.s4 1966171168
    %v316 = vunpack.c.0.s8 %v315
    %v317 = vlaneseq
    %v318 = vshrl.u32 %v317, 7
    %v319 = vsub.s32 %v316, %v318
    %v320 = vrot.slane %v312, %v319
    %v322 = vunpack.c.l.s4 1966171168
    %v323 = vunpack.c.0.s8 %v322
    %v324 = vlaneseq
    %v325 = vshrl.u32 %v324, 7
    %v326 = vsub.s32 %v323, %v325
    %v327 = vrot.slane %v313, %v326
    %v328 = vcombine.low %v320, %v327
    %v330 = vadd.f32 %v207, %v328
    %331 = vst [vmem:[#allocation5] sm:$0xff] %v330
    // Predicated region
    $region14: #{tpu_custom_call.1} parent=1 // pred_check
      _
    $region15: #{tpu_custom_call.1} parent=1 // pred_check_branch
      %333 = sbr.rel (0) target = $region17
    $region16: #{tpu_custom_call.1} parent=1 // pred_region
      %s335 = ssub.s32 128, 128
      %336 = vsyncadd [#allocation4], %s335
      %s338 = sshll.u32 [#allocation5], 4
      %s339 = int_to_ptr.vmem [resolvable:$true] %s338
      %341 = dma.vmem_to_hbm [thread:$0]  %s339, 128, %s1, [#allocation4]
    $region17: #{tpu_custom_call.1} parent=1 // pred_fallthru
      _
    // Predicated region
    $region18: #{tpu_custom_call.1} parent=1 // pred_check
      _
    $region19: #{tpu_custom_call.1} parent=1 // pred_check_branch
      %343 = sbr.rel (0) target = $region21
    $region20: #{tpu_custom_call.1} parent=1 // pred_region
      %344 = dma.done [#allocation4], 128
    $region21: #{tpu_custom_call.1} parent=1 // pred_fallthru
      _
    %345 = vsyncpa [#allocation3], 1
    %346 = vsyncpa [#allocation4], 1

</llo_original>
